<compile_context>
chip_gen: v5e
topology: v5e:2x2
jax: 0.10.0
libtpu: 0.0.40
codegen_flags: <defaults>
</compile_context>

<pallas_src>
import functools

import jax
import jax.numpy as jnp
from jax.experimental import pallas as pl
from jax.experimental.pallas import tpu as pltpu


# Below this many rows, pallas_call launch + DMA setup overhead dwarfs compute;
# let XLA fuse the matmul instead.
_PALLAS_MIN_ROWS = 4096


def _round_up(x, m):
    return ((x + m - 1) // m) * m


def _slot_linear_kernel(x_ref, w_ref, b_ref, o_ref, *, compute_dtype):
    # x_ref: (TM, H) tile in the *input's native dtype* (cast here, not in XLA)
    # w_ref: (H, N)  whole weight, VMEM-resident across grid steps
    # b_ref: (1, N)  whole bias (f32), VMEM-resident across grid steps
    # o_ref: (TM, N) output tile (N = num_slot; no lane padding)
    x = x_ref[...].astype(compute_dtype)
    w = w_ref[...].astype(compute_dtype)
    acc = jnp.dot(x, w, preferred_element_type=jnp.float32)
    o_ref[...] = (acc + b_ref[...]).astype(o_ref.dtype)


def slot_predictor_forward(inputs, weight, bias, *, use_pallas=None,
                           compute_dtype=jnp.bfloat16, tile_m=2048,
                           out_dtype=None):
    """SlotPredictor.forward: (B, S, H) @ (H, N) + (N,) -> (B, S, N)."""
    B, S, H = inputs.shape
    Hw, N = weight.shape
    assert Hw == H, (Hw, H)
    M = B * S
    if out_dtype is None:
        out_dtype = inputs.dtype

    if use_pallas is None:
        use_pallas = M >= _PALLAS_MIN_ROWS
    if not use_pallas:
        # Tiny problem: plain XLA wins. f32 accumulation for path consistency.
        out = jnp.einsum("bsh,hn->bsn", inputs, weight,
                         preferred_element_type=jnp.float32) + bias
        return out.astype(out_dtype)

    # ---------------- Pallas path ----------------
    x2d = inputs.reshape(M, H)                       # contiguous reshape, no cast
    b2d = bias.astype(jnp.float32).reshape(1, N)     # tiny (N,) op, effectively free

    # Row tile: big enough to amortize the ~0.35 us/step pipeline overhead
    # (TM=2048 @ H=64 f32 is ~512 KiB per x buffer -> ~1-2 MiB double-buffered,
    # well inside v5e/v6e 128 MiB and v7x 64 MiB VMEM).
    tm = min(tile_m, M)
    # v7x has 2 TensorCores: keep >=2 balanced grid steps whenever M allows so
    # the "parallel" axis can actually shard across cores.
    if M >= 16 and pl.cdiv(M, tm) < 2:
        tm = _round_up(pl.cdiv(M, 2), 8)
    grid = (pl.cdiv(M, tm),)

    kernel = functools.partial(_slot_linear_kernel, compute_dtype=compute_dtype)

    bytes_accessed = (M * H * inputs.dtype.itemsize      # activations in
                      + H * N * weight.dtype.itemsize    # weight in
                      + N * 4                            # bias in
                      + M * N * jnp.dtype(out_dtype).itemsize)  # logits out

    out2d = pl.pallas_call(
        kernel,
        out_shape=jax.ShapeDtypeStruct((M, N), out_dtype),
        grid_spec=pl.GridSpec(
            grid=grid,
            in_specs=[
                pl.BlockSpec((tm, H), lambda i: (i, 0)),   # x row tile
                pl.BlockSpec((H, N), lambda i: (0, 0)),    # whole weight (resident)
                pl.BlockSpec((1, N), lambda i: (0, 0)),    # whole bias (resident)
            ],
            out_specs=pl.BlockSpec((tm, N), lambda i: (i, 0)),
        ),
        compiler_params=pltpu.CompilerParams(
            # Row tiles are independent -> shard across TensorCores (v7x megacore).
            dimension_semantics=("parallel",),
        ),
        cost_estimate=pl.CostEstimate(
            flops=2 * M * H * N,
            transcendentals=0,
            bytes_accessed=bytes_accessed,
        ),
    )(x2d, weight, b2d)

    return out2d.reshape(B, S, N)


if __name__ == "__main__":
    # Module hyperparameters: params.hidden_dim = 32, bidirection=True -> H = 64,
    # params.num_slot = 16.
    bsz, seq_len = 2, 8
    base_hidden, bidirection = 32, True
    hidden_dim = base_hidden * 2 if bidirection else base_hidden
    num_slot = 16

    key = jax.random.PRNGKey(0)
    k_x, k_w, k_b = jax.random.split(key, 3)

    # nn.Linear-style init: U(-1/sqrt(fan_in), 1/sqrt(fan_in)); weight stored
    # transposed vs. PyTorch as (hidden_dim, num_slot) so the kernel does x @ W.
    bound = 1.0 / jnp.sqrt(jnp.float32(hidden_dim))
    weight = jax.random.uniform(k_w, (hidden_dim, num_slot), jnp.float32,
                                minval=-bound, maxval=bound)
    bias = jax.random.uniform(k_b, (num_slot,), jnp.float32,
                              minval=-bound, maxval=bound)
    inputs = jax.random.normal(k_x, (bsz, seq_len, hidden_dim), jnp.float32)

    ref = inputs @ weight + bias

    # 1) Pallas path, f32 compute: tight check of tiling / bias / 2-step grid
    #    (M=16 rows -> tm=8, grid=(2,)).
    out_f32 = slot_predictor_forward(inputs, weight, bias,
                                     use_pallas=True, compute_dtype=jnp.float32)
    out_f32 = jax.block_until_ready(out_f32)
    assert out_f32.shape == (bsz, seq_len, num_slot)
    assert jnp.allclose(out_f32, ref, atol=1e-5, rtol=1e-5)

    # 2) Pallas path, default bf16 compute (the mem-bound-optimized path, in-kernel
    #    cast, f32 MXU accumulate): loose check.
    out_bf16 = slot_predictor_forward(inputs, weight, bias, use_pallas=True)
    out_bf16 = jax.block_until_ready(out_bf16)
    assert out_bf16.shape == (bsz, seq_len, num_slot)
    assert jnp.allclose(out_bf16, ref, atol=3e-2, rtol=3e-2)

    # 3) Size-based dispatch: at M = 16 rows the heuristic routes to plain XLA.
    out_xla = slot_predictor_forward(inputs, weight, bias)
    out_xla = jax.block_until_ready(out_xla)
    assert jnp.allclose(out_xla, ref, atol=1e-5, rtol=1e-5)

    print("KERNEL_OK")
</pallas_src>

<mosaic_0001>
module attributes {stable_mosaic.version = 11 : i64} {
  func.func @_slot_linear_kernel(%arg0: i32, %arg1: memref<8x64xf32, #tpu.memory_space<vmem>>, %arg2: memref<64x16xf32, #tpu.memory_space<vmem>>, %arg3: memref<1x16xf32, #tpu.memory_space<vmem>>, %arg4: memref<8x16xf32, #tpu.memory_space<vmem>>) attributes {dimension_semantics = [#tpu.dimension_semantics<parallel>], iteration_bounds = array<i64: 2>, scalar_prefetch = 0 : i64, scratch_operands = 0 : i64, tpu.core_type = #tpu.core_type<tc>, window_params = [{transform_indices = @transform_0, window_bounds = array<i64: 8, 64>}, {pipeline_mode = #tpu.pipeline_mode<synchronous>, transform_indices = @transform_1, window_bounds = array<i64: 64, 16>}, {pipeline_mode = #tpu.pipeline_mode<synchronous>, transform_indices = @transform_2, window_bounds = array<i64: 1, 16>}, {transform_indices = @transform_3, window_bounds = array<i64: 8, 16>}]} {
    %c0 = arith.constant 0 : index
    %c0_0 = arith.constant 0 : index
    %0 = vector.load %arg1[%c0, %c0_0] : memref<8x64xf32, #tpu.memory_space<vmem>>, vector<8x64xf32>
    %c0_1 = arith.constant 0 : index
    %c0_2 = arith.constant 0 : index
    %1 = vector.load %arg2[%c0_1, %c0_2] : memref<64x16xf32, #tpu.memory_space<vmem>>, vector<64x16xf32>
    %cst = arith.constant dense<0.000000e+00> : vector<8x16xf32>
    %2 = tpu.matmul %0, %1, %cst {dimension_numbers = #tpu.dot_dimension_numbers<[1], [0], [0], [1], [0, 0, 1, 1], [], []>} : vector<8x64xf32>, vector<64x16xf32>, vector<8x16xf32> -> vector<8x16xf32>
    %c0_3 = arith.constant 0 : index
    %c0_4 = arith.constant 0 : index
    %3 = vector.load %arg3[%c0_3, %c0_4] : memref<1x16xf32, #tpu.memory_space<vmem>>, vector<1x16xf32>
    %4 = vector.broadcast %3 : vector<1x16xf32> to vector<8x16xf32>
    %5 = arith.addf %2, %4 : vector<8x16xf32>
    %c0_5 = arith.constant 0 : index
    %c0_6 = arith.constant 0 : index
    %6 = vector.load %arg4[%c0_5, %c0_6] : memref<8x16xf32, #tpu.memory_space<vmem>>, vector<8x16xf32>
    tpu.vector_store %arg4[%c0_5, %c0_6], %5 {strides = array<i32>} : memref<8x16xf32, #tpu.memory_space<vmem>>, vector<8x16xf32>,
    return
  }
  func.func @transform_0(%arg0: i32) -> (i32, i32) {
    %c0_i32 = arith.constant 0 : i32
    %c0_i32_0 = arith.constant 0 : i32
    return %arg0, %c0_i32 : i32, i32
  }
  func.func @transform_1(%arg0: i32) -> (i32, i32) {
    %c0_i32 = arith.constant 0 : i32
    %c0_i32_0 = arith.constant 0 : i32
    %c0_i32_1 = arith.constant 0 : i32
    return %c0_i32, %c0_i32_0 : i32, i32
  }
  func.func @transform_2(%arg0: i32) -> (i32, i32) {
    %c0_i32 = arith.constant 0 : i32
    %c0_i32_0 = arith.constant 0 : i32
    %c0_i32_1 = arith.constant 0 : i32
    return %c0_i32, %c0_i32_0 : i32, i32
  }
  func.func @transform_3(%arg0: i32) -> (i32, i32) {
    %c0_i32 = arith.constant 0 : i32
    %c0_i32_0 = arith.constant 0 : i32
    return %arg0, %c0_i32 : i32, i32
  }
}

</mosaic_0001>

<llo_original>
// kernel: tpu_custom_call.1
$region0: #{tpu_custom_call.1}
  #allocation0 [shape = 'u32[]', space=smem, size = 0x4, offset = 0x4, fixed_abs, tag = 'smem constant byte address 0x4 - core index']
  #allocation1 [shape = 'u32[72,128]{1,0:T(1,128)}', space=vmem, size = 0x9000, scoped, tag = 'internal scratch']
  %s0 = inlined_call_operand.vmem [shape: f32[16,64], index: 0, kind: input, shape index: {}]
  %s1 = inlined_call_operand.vmem [shape: f32[64,16], index: 1, kind: input, shape index: {}]
  %s2 = inlined_call_operand.vmem [shape: f32[1,16], index: 2, kind: input, shape index: {}]
  %s3 = inlined_call_operand.hbm [shape: f32[16,16], index: 3, kind: output, shape index: {}]
  %s4 = sld [smem:[#allocation0]]
  $region45: #{tpu_custom_call.1} parent=0
    _
  %s6 = ssub.s32 1, %s4
  %s7 = scalar_select 0, %s6, %s4
  $region1: #{tpu_custom_call.1} parent=0
    #allocation2 [shape = 'u8[8192]{0}', space=vmem, size = 0x2000, scoped, tag = 'output window, operand 0']
    #allocation3 [shape = 's32[2]{0}', space=sflag, size = 0x8, scoped, tag = 'scoped memory for tpu_custom_call.1']
    %8 = vsyncpa [#allocation3], 0
    %s9 = scalar_lea.sflag [#allocation3], 1
    %10 = vsyncpa %s9, 0
    loop: start=0, step=1, limit=4
    $region2: #{tpu_custom_call.1} parent=1 // loop_pre_header
      _
    $region3: #{tpu_custom_call.1} parent=1 // loop_header
      %s12 = sphi 0, %s16
      %p13 = scmp.ge.s32.totalorder %s12, 4
      %s22 = sphi 0, %s24
      %s25 = sphi 0, %s22
      %s26 = sphi 0, %s25
      %s42 = sphi 0, %s26
      %s46 = sphi 0, %s46
      %s48 = sphi 0, %s46
      %s49 = sphi 0, %s48
      %s63 = sphi 0, %s49
      %s67 = sphi 0, %s67
      %s69 = sphi 0, %s67
      %s70 = sphi 0, %s69
      %s84 = sphi 0, %s70
      %s90 = sphi 0, %s92
      %s93 = sphi 0, %s90
      %s94 = sphi 0, %s93
      %s110 = sphi 0, %s94
    $region4: #{tpu_custom_call.1} parent=1 // loop_header_branch
      %15 = sbr.rel (%p13) target = $region8
    $region5: #{tpu_custom_call.1} parent=1 // loop_body
      %s17 = ssub.s32 %s12, 1
      %s18 = ssub.s32 %s12, 2
      %s19 = sadd.s32 %s12, 1
      %s20 = ssub.s32 %s12, %s19
      %p21 = scmp.eq.s32.totalorder %s20, 0
      %s23 = sadd.s32 %s22, 1
      %s24 = scalar_select %p21, %s22, %s23
      %p27 = pneg %p21
      %p28 = scmp.eq.s32.totalorder %s12, 1
      %p29 = por %p27, %p28
      %p30 = scmp.ne.s32.totalorder %s22, %s25
      %p31 = scmp.eq.s32.totalorder %s12, 0
      %p32 = por %p30, %p31
      %p33 = scmp.ne.s32.totalorder %s22, %s25
      %p34 = scmp.eq.s32.totalorder %s17, 1
      %p35 = por %p33, %p34
      %p36 = scmp.ne.s32.totalorder %s25, %s26
      %p37 = scmp.eq.s32.totalorder %s17, 0
      %p38 = por %p36, %p37
      %p39 = scmp.ne.s32.totalorder %s25, %s26
      %p40 = scmp.eq.s32.totalorder %s18, 1
      %p41 = por %p39, %p40
      %p43 = scmp.ne.s32.totalorder %s26, %s42
      %p44 = scmp.eq.s32.totalorder %s18, 0
      %p45 = por %p43, %p44
      %s47 = sadd.s32 %s46, 1
      %p50 = scmp.eq.s32.totalorder %s12, 1
      %p51 = scmp.ne.s32.totalorder %s46, %s48
      %p52 = scmp.eq.s32.totalorder %s12, 0
      %p53 = por %p51, %p52
      %p54 = scmp.ne.s32.totalorder %s46, %s48
      %p55 = scmp.eq.s32.totalorder %s17, 1
      %p56 = por %p54, %p55
      %p57 = scmp.ne.s32.totalorder %s48, %s49
      %p58 = scmp.eq.s32.totalorder %s17, 0
      %p59 = por %p57, %p58
      %p60 = scmp.ne.s32.totalorder %s48, %s49
      %p61 = scmp.eq.s32.totalorder %s18, 1
      %p62 = por %p60, %p61
      %p64 = scmp.ne.s32.totalorder %s49, %s63
      %p65 = scmp.eq.s32.totalorder %s18, 0
      %p66 = por %p64, %p65
      %s68 = sadd.s32 %s67, 1
      %p71 = scmp.eq.s32.totalorder %s12, 1
      %p72 = scmp.ne.s32.totalorder %s67, %s69
      %p73 = scmp.eq.s32.totalorder %s12, 0
      %p74 = por %p72, %p73
      %p75 = scmp.ne.s32.totalorder %s67, %s69
      %p76 = scmp.eq.s32.totalorder %s17, 1
      %p77 = por %p75, %p76
      %p78 = scmp.ne.s32.totalorder %s69, %s70
      %p79 = scmp.eq.s32.totalorder %s17, 0
      %p80 = por %p78, %p79
      %p81 = scmp.ne.s32.totalorder %s69, %s70
      %p82 = scmp.eq.s32.totalorder %s18, 1
      %p83 = por %p81, %p82
      %p85 = scmp.ne.s32.totalorder %s70, %s84
      %p86 = scmp.eq.s32.totalorder %s18, 0
      %p87 = por %p85, %p86
      %s88 = ssub.s32 %s12, %s19
      %p89 = scmp.eq.s32.totalorder %s88, 0
      %s91 = sadd.s32 %s90, 1
      %s92 = scalar_select %p89, %s90, %s91
      %p95 = pneg %p89
      %p96 = scmp.eq.s32.totalorder %s12, 1
      %p97 = por %p95, %p96
      %p98 = scmp.ne.s32.totalorder %s90, %s93
      %p99 = scmp.eq.s32.totalorder %s12, 0
      %p100 = por %p98, %p99
      %p101 = scmp.ne.s32.totalorder %s90, %s93
      %p102 = scmp.eq.s32.totalorder %s17, 1
      %p103 = por %p101, %p102
      %p104 = scmp.ne.s32.totalorder %s93, %s94
      %p105 = scmp.eq.s32.totalorder %s17, 0
      %p106 = por %p104, %p105
      %p107 = scmp.ne.s32.totalorder %s93, %s94
      %p108 = scmp.eq.s32.totalorder %s18, 1
      %p109 = por %p107, %p108
      %p111 = scmp.ne.s32.totalorder %s94, %s110
      %p112 = scmp.eq.s32.totalorder %s18, 0
      %p113 = por %p111, %p112
      %p114 = scmp.le.s32.totalorder 1, %s12
      %p115 = scmp.lt.s32.totalorder %s12, 3
      %p116 = pnand %p114, %p115
      %p117 = pneg %p116
      // Predicated region
      $region9: #{tpu_custom_call.1} parent=5 // pred_check
        _
      $region10: #{tpu_custom_call.1} parent=5 // pred_check_branch
        %119 = sbr.rel (%p116) target = $region12
      $region11: #{tpu_custom_call.1} parent=5 // pred_region
        %s120 = ssub.s32 %s12, 1
        // Predicated region
        $region13: #{tpu_custom_call.1} parent=11 // pred_check
          %p121 = pneg %p59
        $region14: #{tpu_custom_call.1} parent=11 // pred_check_branch
          %123 = sbr.rel (%p121) target = $region16
        $region15: #{tpu_custom_call.1} parent=11 // pred_region
          _
        $region16: #{tpu_custom_call.1} parent=11 // pred_fallthru
          _
        // Predicated region
        $region17: #{tpu_custom_call.1} parent=11 // pred_check
          %p124 = pneg %p80
        $region18: #{tpu_custom_call.1} parent=11 // pred_check_branch
          %126 = sbr.rel (%p124) target = $region20
        $region19: #{tpu_custom_call.1} parent=11 // pred_region
          _
        $region20: #{tpu_custom_call.1} parent=11 // pred_fallthru
          _
      $region12: #{tpu_custom_call.1} parent=5 // pred_fallthru
        _
      %p127 = scmp.lt.s32.totalorder %s12, 2
      // Predicated region
      $region21: #{tpu_custom_call.1} parent=5 // pred_check
        %p128 = pneg %p127
      $region22: #{tpu_custom_call.1} parent=5 // pred_check_branch
        %130 = sbr.rel (%p128) target = $region24
      $region23: #{tpu_custom_call.1} parent=5 // pred_region
        // Predicated region
        $region25: #{tpu_custom_call.1} parent=23 // pred_check
          %p131 = pneg %p32
        $region26: #{tpu_custom_call.1} parent=23 // pred_check_branch
          %133 = sbr.rel (%p131) target = $region28
        $region27: #{tpu_custom_call.1} parent=23 // pred_region
          %p134 = scmp.lt.s32.totalorder %s12, 1
          %s135 = scalar_select %p134, %s12, 1
          %s136 = smul.addr %s135, 8
          %s137 = scalar_lea.vmem %s0, %s136
        $region28: #{tpu_custom_call.1} parent=23 // pred_fallthru
          _
      $region24: #{tpu_custom_call.1} parent=5 // pred_fallthru
        _
      %p138 = scmp.le.s32.totalorder 1, %s12
      %p139 = scmp.lt.s32.totalorder %s12, 3
      %p140 = pnand %p138, %p139
      %p141 = pneg %p140
      // Predicated region
      $region29: #{tpu_custom_call.1} parent=5 // pred_check
        _
      $region30: #{tpu_custom_call.1} parent=5 // pred_check_branch
        %143 = sbr.rel (%p140) target = $region32
      $region31: #{tpu_custom_call.1} parent=5 // pred_region
        %s144 = ssub.s32 %s12, 1
        %p145 = scmp.lt.s32.totalorder %s17, 1
        %s146 = scalar_select %p145, %s17, 1
        %s147 = smul.addr %s146, 8
        %s148 = scalar_lea.vmem %s0, %s147
        %p149 = pneg %p38
        %p150 = pneg %p35
        %p151 = pneg %p59
        %p152 = pneg %p56
        %p153 = pneg %p80
        %p154 = pneg %p77
        %p155 = pneg %p106
        %p156 = pneg %p103
        %s157 = sand.u32 %s93, 1
        %s158 = scalar_lea.sflag [#allocation3], %s157
        %s159 = sand.u32 %s93, 1
        %s160 = smul.addr %s159, 8
        %s161 = scalar_lea.vmem [#allocation2], %s160
        %p162 = scmp.lt.s32.totalorder %s17, 1
        %s163 = scalar_select %p162, %s17, 1
        %s164 = smul.addr %s163, 8
        %s165 = scalar_lea.vmem %s0, %s164
        %v166 = vld [vmem:[%s165] sm:$0xff]
        %v167 = vld [vmem:[%s1] sm:$0xff]
        %v168 = vld [vmem:[%s1 + $0x8] sm:$0xff]
        %v169 = vld [vmem:[%s1 + $0x10] sm:$0xff]
        %v170 = vld [vmem:[%s1 + $0x18] sm:$0xff]
        %v171 = vld [vmem:[%s1 + $0x20] sm:$0xff]
        %v172 = vld [vmem:[%s1 + $0x28] sm:$0xff]
        %v173 = vld [vmem:[%s1 + $0x30] sm:$0xff]
        %v174 = vld [vmem:[%s1 + $0x38] sm:$0xff]
        %v175 = vld [vmem:[%s2] sm:$0x1]
        %v177 = vperm.slane %v175, 0
        %vm179 = vcmask 523264
        %v181 = vsel %vm179, %v166, 0
        %183 = vmatpush.msra.mxu0 0.0
        %184 = vmatpush.msra.mxu0 0.0
        %185 = vmatpush.msra.mxu0 0.0
        %186 = vmatpush.msra.mxu0 0.0
        %187 = vmatpush.msra.mxu0 0.0
        %188 = vmatpush.msra.mxu0 0.0
        %189 = vmatpush.msra.mxu0 0.0
        %190 = vmatpush.msra.mxu0 0.0
        %191 = vmatpush.msra.mxu0 %v174
        %192 = vmatpush.msra.mxu0 %v173
        %193 = vmatpush.msra.mxu0 %v172
        %194 = vmatpush.msra.mxu0 %v171
        %195 = vmatpush.msra.mxu0 %v170
        %196 = vmatpush.msra.mxu0 %v169
        %197 = vmatpush.msra.mxu0 %v168
        %198 = vmatpush.msra.mxu0 %v167
        %199 = vmatmul.f32.gmra.mxu0 %v181
        %v200 = vpop.f32.mrf.mxu0
        %v201 = vadd.f32 %v177, %v200
        %202 = vdwg.mxu0
        %vm203 = vcmask 130048
        %204 = vst.msk [vmem:[%s161] sm:$0xff] %vm203, %v201
        %s205 = sand.u32 %s93, 1
        %s206 = scalar_lea.sflag [#allocation3], %s205
        %s207 = sand.u32 %s93, 1
        %s208 = smul.addr %s207, 8
        %s209 = scalar_lea.vmem [#allocation2], %s208
        // Predicated region
        $region33: #{tpu_custom_call.1} parent=31 // pred_check
          %p210 = pneg %p103
        $region34: #{tpu_custom_call.1} parent=31 // pred_check_branch
          %212 = sbr.rel (%p210) target = $region36
        $region35: #{tpu_custom_call.1} parent=31 // pred_region
          %214 = vsyncadd %s206, 0
          %s215 = smul.addr %s17, 8
          %s216 = scalar_lea.hbm %s3, %s215
          %s218 = sshll.u32 %s209, 4
          %s219 = int_to_ptr.vmem [resolvable:$true] %s218
          %s220 = sshll.u32 %s216, 4
          %s221 = int_to_ptr.hbm [resolvable:$true] %s220
          %223 = dma.vmem_to_hbm [thread:$0]  %s219, 128, %s221, %s206
        $region36: #{tpu_custom_call.1} parent=31 // pred_fallthru
          _
      $region32: #{tpu_custom_call.1} parent=5 // pred_fallthru
        _
      %p224 = scmp.le.s32.totalorder 2, %s12
      // Predicated region
      $region37: #{tpu_custom_call.1} parent=5 // pred_check
        %p225 = pneg %p224
      $region38: #{tpu_custom_call.1} parent=5 // pred_check_branch
        %227 = sbr.rel (%p225) target = $region40
      $region39: #{tpu_custom_call.1} parent=5 // pred_region
        %s228 = ssub.s32 %s12, 2
        // Predicated region
        $region41: #{tpu_custom_call.1} parent=39 // pred_check
          %p229 = pneg %p109
        $region42: #{tpu_custom_call.1} parent=39 // pred_check_branch
          %231 = sbr.rel (%p229) target = $region44
        $region43: #{tpu_custom_call.1} parent=39 // pred_region
          %s232 = sand.u32 %s94, 1
          %s233 = scalar_lea.sflag [#allocation3], %s232
          %s234 = sand.u32 %s94, 1
          %s235 = smul.addr %s234, 8
          %s236 = scalar_lea.vmem [#allocation2], %s235
          %238 = dma.done %s233, 128
        $region44: #{tpu_custom_call.1} parent=39 // pred_fallthru
          _
      $region40: #{tpu_custom_call.1} parent=5 // pred_fallthru
        _
    $region6: #{tpu_custom_call.1} parent=1 // loop_footer
      %s16 = sadd.s32 1, %s12
    $region7: #{tpu_custom_call.1} parent=1 // loop_footer_branch
      %11 = sbr.rel target = $region3
    $region8: #{tpu_custom_call.1} parent=1 // loop_exit
      _
    %239 = vsyncpa [#allocation3], 1
    %s240 = scalar_lea.sflag [#allocation3], 1
    %241 = vsyncpa %s240, 1

</llo_original>
